<compile_context>
chip_gen: v7x
topology: tpu7x:2x2x1
jax: 0.10.0
libtpu: 0.0.40
codegen_flags: <defaults>
</compile_context>

<pallas_src>
import jax
import jax.numpy as jnp
from jax import lax
from jax.experimental import pallas as pl
from jax.experimental.pallas import tpu as pltpu


_SQRT_HALF = 0.7071067811865476
_MiB = 1024 * 1024


def _round_up(n, m):
    return ((n + m - 1) // m) * m


def _vmem_capacity_bytes():
    """Per-core VMEM capacity; conservative 64 MiB fallback (v7x) if unknown."""
    try:
        return int(pltpu.get_tpu_info().vmem_capacity_bytes)
    except Exception:
        return 64 * _MiB


def _pick_hidden_tile(hidden, dim, cbytes, budget_bytes):
    """Return (th, hidden_padded).

    th == hidden  -> weights fully resident (single-buffered later).
    Otherwise th is a 128-multiple chunk whose double-buffered W1/W2 slabs fit
    `budget_bytes`; hidden_padded is a multiple of th (zero padding of W1 cols,
    b1 and W2 rows is numerically a no-op for this MLP)."""
    resident_bytes = 2 * dim * hidden * cbytes          # W1 + W2, single-buffered
    if resident_bytes <= budget_bytes or hidden <= 128:
        return hidden, hidden
    th_max = budget_bytes // (2 * 2 * dim * cbytes)      # two slabs, double-buffered
    th_max = max(128, (th_max // 128) * 128)
    th = th_max
    while th >= 128:
        if hidden % th == 0:
            return th, hidden
        th -= 128
    # No 128-multiple divisor fits the budget: keep the VMEM bound, pad hidden.
    th = th_max
    return th, _round_up(hidden, th)


def _pick_sub_chunk(th, target=512):
    """Largest multiple of 128 dividing th that is <= target (else th itself).
    Bounds the live (tm, hs) GELU intermediate inside the kernel."""
    if th <= target:
        return th
    hs = (min(target, th) // 128) * 128
    while hs >= 128:
        if th % hs == 0:
            return hs
        hs -= 128
    return th


def _make_mlp_kernel(hs, n_sub, compute_dtype):
    def kernel(x_ref, w1_ref, b1_ref, w2_ref, b2_ref, o_ref, acc_ref):
        # x_ref:  (tm, dim)  original dtype       w1_ref: (dim, th) compute_dtype
        # b1_ref: (1, th) f32                     w2_ref: (th, dim) compute_dtype
        # b2_ref: (1, dim) f32                    o_ref:  (tm, dim) x.dtype
        # acc_ref:(tm, dim) f32 scratch accumulator (resident across hidden chunks)
        h_idx = pl.program_id(1)

        @pl.when(h_idx == 0)
        def _init():
            acc_ref[...] = jnp.zeros_like(acc_ref)

        # Cast the activation tile in-kernel (saves a wrapper-side HBM round trip).
        x = x_ref[...].astype(compute_dtype)

        def sub_step(s, carry):
            off = pl.multiple_of(s * hs, hs) if n_sub > 1 else 0
            # First matmul on the MXU with f32 accumulation.
            h = jnp.dot(x, w1_ref[:, pl.ds(off, hs)],
                        preferred_element_type=jnp.float32)
            h = h + b1_ref[:, pl.ds(off, hs)]
            # Exact (erf) GELU in f32 (matches torch.nn.GELU default).
            h = 0.5 * h * (1.0 + lax.erf(h * jnp.float32(_SQRT_HALF)))
            # Second matmul: cast GELU output to the MXU dtype, accumulate in f32.
            acc_ref[...] += jnp.dot(h.astype(compute_dtype),
                                    w2_ref[pl.ds(off, hs), :],
                                    preferred_element_type=jnp.float32)
            return carry

        if n_sub == 1:
            sub_step(0, 0)
        else:
            lax.fori_loop(0, n_sub, sub_step, 0, unroll=n_sub <= 8)

        @pl.when(h_idx == pl.num_programs(1) - 1)
        def _finalize():
            o_ref[...] = (acc_ref[...] + b2_ref[...]).astype(o_ref.dtype)

    return kernel


def mlp_pallas(x, w1, b1, w2, b2, *, tm=512, compute_dtype=jnp.bfloat16):
    """x: (B, S, dim). Returns (B, S, dim) in x.dtype."""
    B, S, dim = x.shape
    hidden = w1.shape[1]
    N = B * S
    cbytes = jnp.dtype(compute_dtype).itemsize
    xbytes = jnp.dtype(x.dtype).itemsize
    obytes = xbytes

    # Generation-aware VMEM sizing.
    vmem_cap = _vmem_capacity_bytes()
    vmem_ceiling = min(vmem_cap - max(8 * _MiB, vmem_cap // 8), 112 * _MiB)
    weight_budget = int(0.45 * vmem_cap)

    th, hidden_p = _pick_hidden_tile(hidden, dim, cbytes, weight_budget)
    grid_h = hidden_p // th
    hs = _pick_sub_chunk(th)
    n_sub = th // hs
    resident = grid_h == 1
    wbuf = 1 if resident else 2          # weight/bias buffering factor

    # Token tile: multiple of 16 for packed compute dtypes (bf16 sublane packing),
    # multiple of 8 otherwise; never larger than the rounded token count.
    sub = 16 if cbytes < 4 else 8
    tm_req = max(sub, (int(tm) // sub) * sub)
    tm_req = min(tm_req, _round_up(N, sub))

    def _est(tm_):
        return (
            2 * tm_ * dim * xbytes          # x tiles (double-buffered, original dtype)
            + 2 * tm_ * dim * obytes        # output tiles (double-buffered)
            + wbuf * 2 * dim * th * cbytes  # W1/W2 chunks
            + wbuf * th * 4 + dim * 4       # b1 chunks + b2 (f32)
            + tm_ * dim * 4                 # f32 accumulator scratch
            + tm_ * dim * cbytes            # in-kernel cast copy of x
            + tm_ * hs * 4                  # f32 GELU intermediate
            + tm_ * hs * cbytes             # compute-dtype copy of the intermediate
        )

    # Shrink the token tile until the estimate (with slack) fits the ceiling.
    tm_sel = tm_req
    while tm_sel > sub and int(1.25 * _est(tm_sel)) > vmem_ceiling:
        tm_sel = max(sub, (tm_sel // 2 // sub) * sub)
    tm = tm_sel
    grid_m = pl.cdiv(N, tm)

    # v7x megacore: ensure >= 2 token tiles when there is enough work so the
    # "parallel" axis actually shards across both TensorCores.
    if grid_m == 1 and N > 4 * sub:
        tm_half = _round_up(pl.cdiv(N, 2), sub)
        if pl.cdiv(N, tm_half) >= 2:
            tm = tm_half
            grid_m = pl.cdiv(N, tm)

    est_vmem = _est(tm)
    vmem_limit = int(min(vmem_ceiling,
                         max(32 * _MiB, int(1.4 * est_vmem) + 2 * _MiB)))

    # Parameters: cast once per call only if needed; biases in f32; zero-pad
    # hidden only in the rare no-divisor fallback (numerical no-op).
    w1c = w1 if w1.dtype == compute_dtype else w1.astype(compute_dtype)
    w2c = w2 if w2.dtype == compute_dtype else w2.astype(compute_dtype)
    b1f = b1.astype(jnp.float32)
    b2f = b2.astype(jnp.float32)
    if hidden_p > hidden:
        pad = hidden_p - hidden
        w1c = jnp.pad(w1c, ((0, 0), (0, pad)))
        w2c = jnp.pad(w2c, ((0, pad), (0, 0)))
        b1f = jnp.pad(b1f, (0, pad))

    x2 = x.reshape(N, dim)                 # streamed in original dtype, cast in-kernel
    b1_2d = b1f.reshape(1, hidden_p)
    b2_2d = b2f.reshape(1, dim)

    def _wspec(shape, index_map):
        # Single-buffer blocks whose index never changes (weights resident case).
        if resident:
            return pl.BlockSpec(shape, index_map, pipeline_mode=pl.Buffered(1))
        return pl.BlockSpec(shape, index_map)

    cost = pl.CostEstimate(
        flops=4 * N * dim * hidden_p,             # two matmuls: 2*N*dim*hidden each
        transcendentals=N * hidden_p,             # erf per hidden activation
        bytes_accessed=(
            N * dim * (xbytes + obytes)                               # x in + out
            + (1 if resident else grid_m) * 2 * dim * hidden_p * cbytes  # weights (re-)streamed
            + (hidden_p + dim) * 4                                    # biases
        ),
    )

    out = pl.pallas_call(
        _make_mlp_kernel(hs, n_sub, compute_dtype),
        out_shape=jax.ShapeDtypeStruct((N, dim), x.dtype),
        grid_spec=pltpu.PrefetchScalarGridSpec(
            num_scalar_prefetch=0,
            grid=(grid_m, grid_h),
            in_specs=[
                pl.BlockSpec((tm, dim), lambda i, h: (i, 0)),   # x tile (original dtype)
                _wspec((dim, th), lambda i, h: (0, h)),         # W1 chunk
                _wspec((1, th), lambda i, h: (0, h)),           # b1 chunk (f32)
                _wspec((th, dim), lambda i, h: (h, 0)),         # W2 chunk
                pl.BlockSpec((1, dim), lambda i, h: (0, 0),
                             pipeline_mode=pl.Buffered(1)),     # b2 (f32, constant index)
            ],
            out_specs=pl.BlockSpec((tm, dim), lambda i, h: (i, 0)),
            scratch_shapes=[pltpu.VMEM((tm, dim), jnp.float32)],
        ),
        compiler_params=pltpu.CompilerParams(
            dimension_semantics=("parallel", "arbitrary"),
            vmem_limit_bytes=vmem_limit,
        ),
        cost_estimate=cost,
    )(x2, w1c, b1_2d, w2c, b2_2d)

    return out.reshape(B, S, dim)


def mlp_reference(x, w1, b1, w2, b2, compute_dtype=jnp.float32):
    """Pure-JAX reference with the same casting policy as the kernel."""
    cd = compute_dtype
    h = jnp.dot(x.astype(cd), w1.astype(cd), preferred_element_type=jnp.float32)
    h = h + b1.astype(jnp.float32)
    h = 0.5 * h * (1.0 + lax.erf(h * jnp.float32(_SQRT_HALF)))
    y = jnp.dot(h.astype(cd), w2.astype(cd), preferred_element_type=jnp.float32)
    return (y + b2.astype(jnp.float32)).astype(x.dtype)


if __name__ == "__main__":
    # Small shapes consistent with the module forward: tokens of width `dim`.
    B, S, dim = 2, 8, 32
    hidden = 4 * dim  # hidden_layer_multiplier = 4

    key = jax.random.PRNGKey(0)
    kx, k1, k2, k3, k4 = jax.random.split(key, 5)

    x = jax.random.normal(kx, (B, S, dim), dtype=jnp.float32)

    # Deterministic parameter init (PyTorch nn.Linear-style uniform bounds).
    bound1 = 1.0 / (dim ** 0.5)
    bound2 = 1.0 / (hidden ** 0.5)
    w1 = jax.random.uniform(k1, (dim, hidden), jnp.float32, -bound1, bound1)
    b1 = jax.random.uniform(k2, (hidden,), jnp.float32, -bound1, bound1)
    w2 = jax.random.uniform(k3, (hidden, dim), jnp.float32, -bound2, bound2)
    b2 = jax.random.uniform(k4, (dim,), jnp.float32, -bound2, bound2)

    # Default fast path: bf16 MXU inputs, f32 accumulation / bias / GELU.
    y_bf16 = jax.block_until_ready(mlp_pallas(x, w1, b1, w2, b2))
    ref_bf16 = mlp_reference(x, w1, b1, w2, b2, compute_dtype=jnp.bfloat16)
    assert jnp.allclose(y_bf16, ref_bf16, atol=1e-2, rtol=1e-2), "bf16 path mismatch"

    # Full-precision path (matches the f32 / torch-exact-GELU reference tightly).
    y_f32 = jax.block_until_ready(
        mlp_pallas(x, w1, b1, w2, b2, compute_dtype=jnp.float32)
    )
    ref_f32 = mlp_reference(x, w1, b1, w2, b2, compute_dtype=jnp.float32)
    assert jnp.allclose(y_f32, ref_f32, atol=2e-5, rtol=2e-5), "f32 path mismatch"

    print("KERNEL_OK")
</pallas_src>

<mosaic_0001>
module attributes {stable_mosaic.version = 11 : i64} {
  func.func @kernel(%arg0: i32, %arg1: i32, %arg2: memref<16x32xf32, #tpu.memory_space<vmem>>, %arg3: memref<32x128xbf16, #tpu.memory_space<vmem>>, %arg4: memref<1x128xf32, #tpu.memory_space<vmem>>, %arg5: memref<128x32xbf16, #tpu.memory_space<vmem>>, %arg6: memref<1x32xf32, #tpu.memory_space<vmem>>, %arg7: memref<16x32xf32, #tpu.memory_space<vmem>>, %arg8: memref<16x32xf32, #tpu.memory_space<vmem>>) attributes {dimension_semantics = [#tpu.dimension_semantics<parallel>, #tpu.dimension_semantics<arbitrary>], iteration_bounds = array<i64: 1, 1>, scalar_prefetch = 0 : i64, scratch_operands = 1 : i64, tpu.core_type = #tpu.core_type<tc>, window_params = [{transform_indices = @transform_0, window_bounds = array<i64: 16, 32>}, {pipeline_mode = #tpu.pipeline_mode<synchronous>, transform_indices = @transform_1, window_bounds = array<i64: 32, 128>}, {pipeline_mode = #tpu.pipeline_mode<synchronous>, transform_indices = @transform_2, window_bounds = array<i64: 1, 128>}, {pipeline_mode = #tpu.pipeline_mode<synchronous>, transform_indices = @transform_3, window_bounds = array<i64: 128, 32>}, {pipeline_mode = #tpu.pipeline_mode<synchronous>, transform_indices = @transform_4, window_bounds = array<i64: 1, 32>}, {transform_indices = @transform_5, window_bounds = array<i64: 16, 32>}]} {
    %c0_i32 = arith.constant 0 : i32
    %0 = arith.cmpi eq, %arg1, %c0_i32 : i32
    %1 = arith.extui %0 : i1 to i32
    %c0_i32_0 = arith.constant 0 : i32
    %2 = arith.cmpi ne, %1, %c0_i32_0 : i32
    scf.if %2 {
      %cst_18 = arith.constant 0.000000e+00 : f32
      %27 = vector.broadcast %cst_18 : f32 to vector<16x32xf32>
      %c0_19 = arith.constant 0 : index
      %c0_20 = arith.constant 0 : index
      %28 = vector.load %arg8[%c0_19, %c0_20] : memref<16x32xf32, #tpu.memory_space<vmem>>, vector<16x32xf32>
      tpu.vector_store %arg8[%c0_19, %c0_20], %27 {strides = array<i32>} : memref<16x32xf32, #tpu.memory_space<vmem>>, vector<16x32xf32>,
    } else {
    }
    %c0 = arith.constant 0 : index
    %c0_1 = arith.constant 0 : index
    %3 = vector.load %arg2[%c0, %c0_1] : memref<16x32xf32, #tpu.memory_space<vmem>>, vector<16x32xf32>
    %4 = arith.truncf %3 : vector<16x32xf32> to vector<16x32xbf16>
    %c0_2 = arith.constant 0 : index
    %c0_3 = arith.constant 0 : index
    %5 = vector.load %arg3[%c0_2, %c0_3] : memref<32x128xbf16, #tpu.memory_space<vmem>>, vector<32x128xbf16>
    %cst = arith.constant dense<0.000000e+00> : vector<16x128xf32>
    %6 = tpu.matmul %4, %5, %cst {dimension_numbers = #tpu.dot_dimension_numbers<[1], [0], [0], [1], [0, 0, 1, 1], [], []>} : vector<16x32xbf16>, vector<32x128xbf16>, vector<16x128xf32> -> vector<16x128xf32>
    %c0_4 = arith.constant 0 : index
    %c0_5 = arith.constant 0 : index
    %7 = vector.load %arg4[%c0_4, %c0_5] : memref<1x128xf32, #tpu.memory_space<vmem>>, vector<1x128xf32>
    %8 = vector.broadcast %7 : vector<1x128xf32> to vector<16x128xf32>
    %9 = arith.addf %6, %8 : vector<16x128xf32>
    %cst_6 = arith.constant 5.000000e-01 : f32
    %10 = vector.broadcast %cst_6 : f32 to vector<16x128xf32>
    %11 = arith.mulf %10, %9 : vector<16x128xf32>
    %cst_7 = arith.constant 0.707106769 : f32
    %12 = vector.broadcast %cst_7 : f32 to vector<16x128xf32>
    %13 = arith.mulf %9, %12 : vector<16x128xf32>
    %14 = math.erf %13 : vector<16x128xf32>
    %cst_8 = arith.constant 1.000000e+00 : f32
    %15 = vector.broadcast %cst_8 : f32 to vector<16x128xf32>
    %16 = arith.addf %15, %14 : vector<16x128xf32>
    %17 = arith.mulf %11, %16 : vector<16x128xf32>
    %c0_9 = arith.constant 0 : index
    %c0_10 = arith.constant 0 : index
    %18 = vector.load %arg8[%c0_9, %c0_10] : memref<16x32xf32, #tpu.memory_space<vmem>>, vector<16x32xf32>
    %19 = arith.truncf %17 : vector<16x128xf32> to vector<16x128xbf16>
    %c0_11 = arith.constant 0 : index
    %c0_12 = arith.constant 0 : index
    %20 = vector.load %arg5[%c0_11, %c0_12] : memref<128x32xbf16, #tpu.memory_space<vmem>>, vector<128x32xbf16>
    %cst_13 = arith.constant dense<0.000000e+00> : vector<16x32xf32>
    %21 = tpu.matmul %19, %20, %cst_13 {dimension_numbers = #tpu.dot_dimension_numbers<[1], [0], [0], [1], [0, 0, 1, 1], [], []>} : vector<16x128xbf16>, vector<128x32xbf16>, vector<16x32xf32> -> vector<16x32xf32>
    %22 = arith.addf %18, %21 : vector<16x32xf32>
    %c0_14 = arith.constant 0 : index
    %c0_15 = arith.constant 0 : index
    %23 = vector.load %arg8[%c0_14, %c0_15] : memref<16x32xf32, #tpu.memory_space<vmem>>, vector<16x32xf32>
    tpu.vector_store %arg8[%c0_14, %c0_15], %22 {strides = array<i32>} : memref<16x32xf32, #tpu.memory_space<vmem>>, vector<16x32xf32>,
    %c0_i32_16 = arith.constant 0 : i32
    %24 = arith.cmpi eq, %arg1, %c0_i32_16 : i32
    %25 = arith.extui %24 : i1 to i32
    %c0_i32_17 = arith.constant 0 : i32
    %26 = arith.cmpi ne, %25, %c0_i32_17 : i32
    scf.if %26 {
      %c0_18 = arith.constant 0 : index
      %c0_19 = arith.constant 0 : index
      %27 = vector.load %arg8[%c0_18, %c0_19] : memref<16x32xf32, #tpu.memory_space<vmem>>, vector<16x32xf32>
      %c0_20 = arith.constant 0 : index
      %c0_21 = arith.constant 0 : index
      %28 = vector.load %arg6[%c0_20, %c0_21] : memref<1x32xf32, #tpu.memory_space<vmem>>, vector<1x32xf32>
      %29 = vector.broadcast %28 : vector<1x32xf32> to vector<16x32xf32>
      %30 = arith.addf %27, %29 : vector<16x32xf32>
      %c0_22 = arith.constant 0 : index
      %c0_23 = arith.constant 0 : index
      %31 = vector.load %arg7[%c0_22, %c0_23] : memref<16x32xf32, #tpu.memory_space<vmem>>, vector<16x32xf32>
      tpu.vector_store %arg7[%c0_22, %c0_23], %30 {strides = array<i32>} : memref<16x32xf32, #tpu.memory_space<vmem>>, vector<16x32xf32>,
    } else {
    }
    return
  }
  func.func @transform_0(%arg0: i32, %arg1: i32) -> (i32, i32) {
    %c0_i32 = arith.constant 0 : i32
    %c0_i32_0 = arith.constant 0 : i32
    return %arg0, %c0_i32 : i32, i32
  }
  func.func @transform_1(%arg0: i32, %arg1: i32) -> (i32, i32) {
    %c0_i32 = arith.constant 0 : i32
    %c0_i32_0 = arith.constant 0 : i32
    return %c0_i32, %arg1 : i32, i32
  }
  func.func @transform_2(%arg0: i32, %arg1: i32) -> (i32, i32) {
    %c0_i32 = arith.constant 0 : i32
    %c0_i32_0 = arith.constant 0 : i32
    return %c0_i32, %arg1 : i32, i32
  }
  func.func @transform_3(%arg0: i32, %arg1: i32) -> (i32, i32) {
    %c0_i32 = arith.constant 0 : i32
    %c0_i32_0 = arith.constant 0 : i32
    return %arg1, %c0_i32 : i32, i32
  }
  func.func @transform_4(%arg0: i32, %arg1: i32) -> (i32, i32) {
    %c0_i32 = arith.constant 0 : i32
    %c0_i32_0 = arith.constant 0 : i32
    %c0_i32_1 = arith.constant 0 : i32
    return %c0_i32, %c0_i32_0 : i32, i32
  }
  func.func @transform_5(%arg0: i32, %arg1: i32) -> (i32, i32) {
    %c0_i32 = arith.constant 0 : i32
    %c0_i32_0 = arith.constant 0 : i32
    return %arg0, %c0_i32 : i32, i32
  }
}

</mosaic_0001>

<llo_original>
// kernel: tpu_custom_call.1
$region0: #{tpu_custom_call.1}
  #allocation0 [shape = 'u32[]', space=smem, size = 0x4, offset = 0x4, fixed_abs, tag = 'smem constant byte address 0x4 - core index']
  #allocation1 [shape = 'u32[144,128]{1,0:T(1,128)}', space=vmem, size = 0x12000, scoped, tag = 'internal scratch']
  #allocation2 [shape = 'f32[16,32]{1,0:T(8,128)}', space=vmem, size = 0x2000, scoped, tag = 'scratch operand']
  %s0 = inlined_call_operand.vmem [shape: f32[16,32], index: 0, kind: input, shape index: {}]
  %s1 = inlined_call_operand.vmem [shape: bf16[32,128], index: 1, kind: input, shape index: {}]
  %s2 = inlined_call_operand.vmem [shape: f32[1,128], index: 2, kind: input, shape index: {}]
  %s3 = inlined_call_operand.vmem [shape: bf16[128,32], index: 3, kind: input, shape index: {}]
  %s4 = inlined_call_operand.vmem [shape: f32[1,32], index: 4, kind: input, shape index: {}]
  %s5 = inlined_call_operand.hbm [shape: f32[16,32], index: 5, kind: output, shape index: {}]
  %s6 = sld [smem:[#allocation0]]
  $region38: #{tpu_custom_call.1} parent=0
    _
  %s8 = ssub.s32 1, %s6
  %s9 = scalar_select 0, %s8, %s6
  $region1: #{tpu_custom_call.1} parent=0
    #allocation3 [shape = 'u8[8192]{0}', space=vmem, size = 0x2000, scoped, tag = 'output window, operand 0, single buffered']
    #allocation4 [shape = 's32[1]{0}', space=sflag, size = 0x4, scoped, tag = 'scoped memory for tpu_custom_call.1']
    %10 = vsyncpa [#allocation4], 0
    // Predicated region
    $region2: #{tpu_custom_call.1} parent=1 // pred_check
      _
    $region3: #{tpu_custom_call.1} parent=1 // pred_check_branch
      %12 = sbr.rel (0) target = $region5
    $region4: #{tpu_custom_call.1} parent=1 // pred_region
      _
    $region5: #{tpu_custom_call.1} parent=1 // pred_fallthru
      _
    // Predicated region
    $region6: #{tpu_custom_call.1} parent=1 // pred_check
      _
    $region7: #{tpu_custom_call.1} parent=1 // pred_check_branch
      %14 = sbr.rel (0) target = $region9
    $region8: #{tpu_custom_call.1} parent=1 // pred_region
      _
    $region9: #{tpu_custom_call.1} parent=1 // pred_fallthru
      _
    // Predicated region
    $region10: #{tpu_custom_call.1} parent=1 // pred_check
      _
    $region11: #{tpu_custom_call.1} parent=1 // pred_check_branch
      %16 = sbr.rel (0) target = $region13
    $region12: #{tpu_custom_call.1} parent=1 // pred_region
      _
    $region13: #{tpu_custom_call.1} parent=1 // pred_fallthru
      _
    // Predicated region
    $region14: #{tpu_custom_call.1} parent=1 // pred_check
      _
    $region15: #{tpu_custom_call.1} parent=1 // pred_check_branch
      %18 = sbr.rel (0) target = $region17
    $region16: #{tpu_custom_call.1} parent=1 // pred_region
      _
    $region17: #{tpu_custom_call.1} parent=1 // pred_fallthru
      _
    // Predicated region
    $region18: #{tpu_custom_call.1} parent=1 // pred_check
      _
    $region19: #{tpu_custom_call.1} parent=1 // pred_check_branch
      %20 = sbr.rel (0) target = $region21
    $region20: #{tpu_custom_call.1} parent=1 // pred_region
      _
    $region21: #{tpu_custom_call.1} parent=1 // pred_fallthru
      _
    %p22 = scmp.eq.s32.totalorder 0, 0
    // Predicated region
    $region22: #{tpu_custom_call.1} parent=1 // pred_check
      %p23 = pneg %p22
    $region23: #{tpu_custom_call.1} parent=1 // pred_check_branch
      %25 = sbr.rel (%p23) target = $region25
    $region24: #{tpu_custom_call.1} parent=1 // pred_region
      %vm26 = vcmask 261120
      %27 = vst.msk [vmem:[#allocation2] sm:$0xff] %vm26, 0.0
      %28 = vst.msk [vmem:[#allocation2 + $0x8] sm:$0xff] %vm26, 0.0
    $region25: #{tpu_custom_call.1} parent=1 // pred_fallthru
      _
    %v29 = vld [vmem:[%s0] sm:$0xff]
    %v30 = vld [vmem:[%s0 + $0x8] sm:$0xff]
    %v31 = vpack.c.bf16 %v30, %v29
    %v32 = vld [vmem:[%s1] sm:$0xf]
    %v33 = vld [vmem:[%s1 + $0x4] sm:$0xf]
    %v34 = vld [vmem:[%s1 + $0x8] sm:$0xf]
    %v35 = vld [vmem:[%s1 + $0xc] sm:$0xf]
    %v36 = vld [vmem:[%s2] sm:$0x1]
    %v38 = vlaneseq
    %v39 = vshrl.u32 %v38, 7
    %v40 = vsub.s32 0, %v39
    %v41 = vrot.slane %v36, %v40
    %v47 = vunpack.c.l.b16 %v32
    %v48 = vunpack.c.l.b16 %v33
    %v49 = vunpack.c.l.b16 %v34
    %v50 = vunpack.c.l.b16 %v35
    %v51 = vpack.c.b16 %v48, %v47
    %v52 = vpack.c.b16 %v50, %v49
    %vm55 = vcmask 261120
    %v57 = vsel %vm55, %v31, 0
    %59 = vmatprep.subr.bf16.mxu0 0
    %60 = vmatpush1.bf16.msra.mxu0 %v51
    %61 = vmatprep.subr.bf16.mxu0 0
    %62 = vmatpush1.bf16.msra.mxu0 %v52
    %63 = vmatprep.subr.bf16.mxu0 0
    %64 = vmatpush1.bf16.msra.mxu0 0
    %65 = vmatprep.subr.bf16.mxu0 0
    %66 = vmatpush1.bf16.msra.mxu0 0
    %67 = vmatprep.subr.bf16.mxu0 0
    %68 = vmatpush1.bf16.msra.mxu0 0
    %69 = vmatprep.subr.bf16.mxu0 0
    %70 = vmatpush1.bf16.msra.mxu0 0
    %71 = vmatprep.subr.bf16.mxu0 0
    %72 = vmatpush1.bf16.msra.mxu0 0
    %73 = vmatprep.subr.bf16.mxu0 0
    %74 = vmatpush1.bf16.msra.mxu0 0
    %75 = vmatprep.subr.bf16.mxu0 0
    %76 = vmatpush1.bf16.msra.mxu0 0
    %77 = vmatprep.subr.bf16.mxu0 0
    %78 = vmatpush1.bf16.msra.mxu0 0
    %79 = vmatprep.subr.bf16.mxu0 0
    %80 = vmatpush1.bf16.msra.mxu0 0
    %81 = vmatprep.subr.bf16.mxu0 0
    %82 = vmatpush1.bf16.msra.mxu0 0
    %83 = vmatprep.subr.bf16.mxu0 0
    %84 = vmatpush1.bf16.msra.mxu0 0
    %85 = vmatprep.subr.bf16.mxu0 0
    %86 = vmatpush1.bf16.msra.mxu0 0
    %87 = vmatprep.subr.bf16.mxu0 0
    %88 = vmatpush1.bf16.msra.mxu0 0
    %89 = vmatprep.subr.bf16.mxu0 0
    %90 = vmatpush1.bf16.msra.mxu0 0
    %91 = vmatprep.mubr.bf16.mxu0 0
    %92 = vmatmul.mubr.bf16.gmra.mrb[0].mxu0 %v57
    %v93 = vpop.f32.mrb[0].mxu0
    %v94 = vadd.f32 %v41, %v93
    %v95 = vpop.f32.mrb[0].mxu0
    %v96 = vpop.f32.mrb[0].mxu0
    %v97 = vadd.f32 %v41, %v96
    %v98 = vpop.f32.mrb[0].mxu0
    %99 = vdwg.mxu0
    %v100 = vmul.f32 %v94, 0.5
    %v101 = vmul.f32 %v97, 0.5
    %v102 = vmul.f32 %v94, 0.70710677
    %v103 = vmul.f32 %v97, 0.70710677
    %v104 = verf.f32.pop %v102
    %v105 = verf.f32.pop %v103
    %v106 = vadd.f32 %v104, 1.0
    %v107 = vadd.f32 %v105, 1.0
    %v108 = vmul.f32 %v100, %v106
    %v109 = vmul.f32 %v101, %v107
    %v110 = vld [vmem:[#allocation2] sm:$0xff]
    %v111 = vld [vmem:[#allocation2 + $0x8] sm:$0xff]
    %v112 = vpack.c.bf16 %v109, %v108
    %v113 = vld [vmem:[%s3] sm:$0xf]
    %v114 = vld [vmem:[%s3 + $0x4] sm:$0xf]
    %v115 = vld [vmem:[%s3 + $0x8] sm:$0xf]
    %v116 = vld [vmem:[%s3 + $0xc] sm:$0xf]
    %v117 = vld [vmem:[%s3 + $0x10] sm:$0xf]
    %v118 = vld [vmem:[%s3 + $0x14] sm:$0xf]
    %v119 = vld [vmem:[%s3 + $0x18] sm:$0xf]
    %v120 = vld [vmem:[%s3 + $0x1c] sm:$0xf]
    %v121 = vld [vmem:[%s3 + $0x20] sm:$0xf]
    %v122 = vld [vmem:[%s3 + $0x24] sm:$0xf]
    %v123 = vld [vmem:[%s3 + $0x28] sm:$0xf]
    %v124 = vld [vmem:[%s3 + $0x2c] sm:$0xf]
    %v125 = vld [vmem:[%s3 + $0x30] sm:$0xf]
    %v126 = vld [vmem:[%s3 + $0x34] sm:$0xf]
    %v127 = vld [vmem:[%s3 + $0x38] sm:$0xf]
    %v128 = vld [vmem:[%s3 + $0x3c] sm:$0xf]
    %v145 = vunpack.c.l.b16 %v113
    %v146 = vunpack.c.l.b16 %v114
    %v147 = vunpack.c.l.b16 %v115
    %v148 = vunpack.c.l.b16 %v116
    %v149 = vunpack.c.l.b16 %v117
    %v150 = vunpack.c.l.b16 %v118
    %v151 = vunpack.c.l.b16 %v119
    %v152 = vunpack.c.l.b16 %v120
    %v153 = vunpack.c.l.b16 %v121
    %v154 = vunpack.c.l.b16 %v122
    %v155 = vunpack.c.l.b16 %v123
    %v156 = vunpack.c.l.b16 %v124
    %v157 = vunpack.c.l.b16 %v125
    %v158 = vunpack.c.l.b16 %v126
    %v159 = vunpack.c.l.b16 %v127
    %v160 = vunpack.c.l.b16 %v128
    %v161 = vpack.c.b16 %v146, %v145
    %v162 = vpack.c.b16 %v148, %v147
    %v163 = vpack.c.b16 %v150, %v149
    %v164 = vpack.c.b16 %v152, %v151
    %v165 = vpack.c.b16 %v154, %v153
    %v166 = vpack.c.b16 %v156, %v155
    %v167 = vpack.c.b16 %v158, %v157
    %v168 = vpack.c.b16 %v160, %v159
    %177 = vmatprep.subr.bf16.mxu0 0
    %178 = vmatpush1.bf16.msra.mxu0 %v161
    %179 = vmatprep.subr.bf16.mxu0 0
    %180 = vmatpush1.bf16.msra.mxu0 %v162
    %181 = vmatprep.subr.bf16.mxu0 0
    %182 = vmatpush1.bf16.msra.mxu0 %v163
    %183 = vmatprep.subr.bf16.mxu0 0
    %184 = vmatpush1.bf16.msra.mxu0 %v164
    %185 = vmatprep.subr.bf16.mxu0 0
    %186 = vmatpush1.bf16.msra.mxu0 %v165
    %187 = vmatprep.subr.bf16.mxu0 0
    %188 = vmatpush1.bf16.msra.mxu0 %v166
    %189 = vmatprep.subr.bf16.mxu0 0
    %190 = vmatpush1.bf16.msra.mxu0 %v167
    %191 = vmatprep.subr.bf16.mxu0 0
    %192 = vmatpush1.bf16.msra.mxu0 %v168
    %193 = vmatprep.subr.bf16.mxu0 0
    %194 = vmatpush1.bf16.msra.mxu0 0
    %195 = vmatprep.subr.bf16.mxu0 0
    %196 = vmatpush1.bf16.msra.mxu0 0
    %197 = vmatprep.subr.bf16.mxu0 0
    %198 = vmatpush1.bf16.msra.mxu0 0
    %199 = vmatprep.subr.bf16.mxu0 0
    %200 = vmatpush1.bf16.msra.mxu0 0
    %201 = vmatprep.subr.bf16.mxu0 0
    %202 = vmatpush1.bf16.msra.mxu0 0
    %203 = vmatprep.subr.bf16.mxu0 0
    %204 = vmatpush1.bf16.msra.mxu0 0
    %205 = vmatprep.subr.bf16.mxu0 0
    %206 = vmatpush1.bf16.msra.mxu0 0
    %207 = vmatprep.subr.bf16.mxu0 0
    %208 = vmatpush1.bf16.msra.mxu0 0
    %209 = vmatprep.mubr.bf16.mxu0 0
    %210 = vmatmul.mubr.bf16.gmra.mrb[0].mxu0 %v112
    %v211 = vpop.f32.mrb[0].mxu0
    %v212 = vadd.f32 0.0, %v211
    %v213 = vpop.f32.mrb[0].mxu0
    %v214 = vpop.f32.mrb[0].mxu0
    %v215 = vadd.f32 0.0, %v214
    %v216 = vpop.f32.mrb[0].mxu0
    %217 = vdwg.mxu0
    %v218 = vadd.f32 %v110, %v212
    %v219 = vadd.f32 %v111, %v215
    %220 = vst.msk [vmem:[#allocation2] sm:$0xff] %vm55, %v218
    %221 = vst.msk [vmem:[#allocation2 + $0x8] sm:$0xff] %vm55, %v219
    // Predicated region
    $region26: #{tpu_custom_call.1} parent=1 // pred_check
      %p222 = pneg %p22
    $region27: #{tpu_custom_call.1} parent=1 // pred_check_branch
      %224 = sbr.rel (%p222) target = $region29
    $region28: #{tpu_custom_call.1} parent=1 // pred_region
      %v225 = vld [vmem:[#allocation2] sm:$0xff]
      %v226 = vld [vmem:[#allocation2 + $0x8] sm:$0xff]
      %v227 = vld [vmem:[%s4] sm:$0x1]
      %v229 = vlaneseq
      %v230 = vshrl.u32 %v229, 7
      %v231 = vsub.s32 0, %v230
      %v232 = vrot.slane %v227, %v231
      %v234 = vadd.f32 %v225, %v232
      %v235 = vadd.f32 %v226, %v232
      %236 = vst.msk [vmem:[#allocation3] sm:$0xff] %vm55, %v234
      %237 = vst.msk [vmem:[#allocation3 + $0x8] sm:$0xff] %vm55, %v235
    $region29: #{tpu_custom_call.1} parent=1 // pred_fallthru
      _
    // Predicated region
    $region30: #{tpu_custom_call.1} parent=1 // pred_check
      _
    $region31: #{tpu_custom_call.1} parent=1 // pred_check_branch
      %239 = sbr.rel (0) target = $region33
    $region32: #{tpu_custom_call.1} parent=1 // pred_region
      %s241 = ssub.s32 256, 256
      %242 = vsyncadd [#allocation4], %s241
      %s243 = sshll.u32 [#allocation3], 4
      %s244 = int_to_ptr.vmem [resolvable:$true] %s243
      %249 = dma.vmem_to_hbm [thread:$0]  %s244, 256, %s5, [#allocation4], 128, 128, 8
    $region33: #{tpu_custom_call.1} parent=1 // pred_fallthru
      _
    // Predicated region
    $region34: #{tpu_custom_call.1} parent=1 // pred_check
      _
    $region35: #{tpu_custom_call.1} parent=1 // pred_check_branch
      %251 = sbr.rel (0) target = $region37
    $region36: #{tpu_custom_call.1} parent=1 // pred_region
      %252 = dma.done [#allocation4], 256
    $region37: #{tpu_custom_call.1} parent=1 // pred_fallthru
      _
    %253 = vsyncpa [#allocation4], 1

</llo_original>
